<compile_context>
chip_gen: v7x
topology: tpu7x:2x2x1
jax: 0.10.0
libtpu: 0.0.40
codegen_flags: <defaults>
</compile_context>

<pallas_src>
import jax
import jax.numpy as jnp
from jax.experimental import pallas as pl
from jax.experimental.pallas import tpu as pltpu


LANE = 128


def _round_up(n, m):
    return ((n + m - 1) // m) * m


def mlp_kernel(x_ref, w1_ref, b1_ref, w2_ref, b2_ref, w3_ref, b3_ref, o_ref):
    # fc1 + ReLU (MXU matmul with f32 accumulation; bias/ReLU in f32 on the VPU).
    h1 = jnp.dot(x_ref[...], w1_ref[...], preferred_element_type=jnp.float32)
    h1 = jnp.maximum(h1 + b1_ref[...], 0.0)
    # dropout1: identity in eval mode.
    # fc2 + ReLU.
    h2 = jnp.dot(h1.astype(w2_ref.dtype), w2_ref[...],
                 preferred_element_type=jnp.float32)
    h2 = jnp.maximum(h2 + b2_ref[...], 0.0)
    # dropout2: identity in eval mode.
    # fc3: out_features == 1 -> VPU multiply + lane reduction instead of a
    # 1-wide MXU matmul.  w3_ref is the (1, H2) row form of w3.
    out = jnp.sum(h2 * w3_ref[...], axis=-1, keepdims=True) + b3_ref[...]
    o_ref[...] = out.astype(o_ref.dtype)


def pad_params(params):
    """Zero-pad hidden dims to multiples of 128 and put w3 in (1, H2) row form."""
    w1, b1, w2, b2, w3, b3 = params
    f_in, h1 = w1.shape
    h2 = w2.shape[1]
    h1p = _round_up(h1, LANE)  # 360 -> 384
    h2p = _round_up(h2, LANE)  # 180 -> 256

    def pad2(a, rows, cols):
        return jnp.pad(a, ((0, rows - a.shape[0]), (0, cols - a.shape[1])))

    w1p = pad2(w1, f_in, h1p)
    b1p = pad2(b1, 1, h1p)
    w2p = pad2(w2, h1p, h2p)
    b2p = pad2(b2, 1, h2p)
    w3row = pad2(w3.T, 1, h2p)  # (1, 180) -> (1, 256)
    return w1p, b1p, w2p, b2p, w3row, b3


def mlp_forward(x, padded_params, *, tile_b=512, compute_dtype=jnp.float32):
    w1, b1, w2, b2, w3row, b3 = padded_params
    B, F = x.shape
    H1 = w1.shape[1]
    H2 = w2.shape[1]

    # Batch tile: multiple of 8, no larger than the (padded) batch.
    tile_b = min(tile_b, _round_up(B, 8))
    Bp = _round_up(B, tile_b)
    if Bp != B:
        x = jnp.pad(x, ((0, Bp - B), (0, 0)))

    # Optional bf16 MXU operands (halves x/weight HBM+VMEM traffic on v6e/v7x);
    # accumulation stays f32 via preferred_element_type.
    x = x.astype(compute_dtype)
    w1 = w1.astype(compute_dtype)
    w2 = w2.astype(compute_dtype)

    grid = (Bp // tile_b,)
    const = lambda i: (0, 0)  # resident blocks: DMA'd once, reused every step.

    flops = 2 * Bp * (F * H1 + H1 * H2 + H2)
    bytes_accessed = (
        x.size * x.dtype.itemsize
        + sum(a.size * a.dtype.itemsize for a in (w1, b1, w2, b2, w3row, b3))
        + Bp * 4
    )

    out = pl.pallas_call(
        mlp_kernel,
        out_shape=jax.ShapeDtypeStruct((Bp, 1), jnp.float32),
        grid=grid,
        in_specs=[
            pl.BlockSpec((tile_b, F), lambda i: (i, 0)),  # x tile, pipelined
            pl.BlockSpec((F, H1), const),                 # w1 (resident)
            pl.BlockSpec((1, H1), const),                 # b1
            pl.BlockSpec((H1, H2), const),                # w2
            pl.BlockSpec((1, H2), const),                 # b2
            pl.BlockSpec((1, H2), const),                 # w3 row
            pl.BlockSpec((1, 1), const),                  # b3
        ],
        # Note: the (tile_b, 1) output lowers to masked 1-lane stores; output
        # traffic is tiny (4 B/row) so we keep the natural (B, 1) layout.
        out_specs=pl.BlockSpec((tile_b, 1), lambda i: (i, 0)),
        compiler_params=pltpu.CompilerParams(
            dimension_semantics=("parallel",),  # shard batch steps across TCs (v7x)
        ),
        cost_estimate=pl.CostEstimate(
            flops=flops, transcendentals=0, bytes_accessed=bytes_accessed),
    )(x, w1, b1, w2, b2, w3row, b3)

    return out[:B]


def init_params(key, input_size):
    # Deterministic init mimicking PyTorch nn.Linear defaults:
    # U(-1/sqrt(fan_in), +1/sqrt(fan_in)) for weights and biases.
    def linear(key, fan_in, fan_out):
        kw, kb = jax.random.split(key)
        bound = 1.0 / jnp.sqrt(fan_in)
        w = jax.random.uniform(kw, (fan_in, fan_out), jnp.float32, -bound, bound)
        b = jax.random.uniform(kb, (1, fan_out), jnp.float32, -bound, bound)
        return w, b

    k1, k2, k3 = jax.random.split(key, 3)
    w1, b1 = linear(k1, input_size, 360)
    w2, b2 = linear(k2, 360, 180)
    w3, b3 = linear(k3, 180, 1)
    return w1, b1, w2, b2, w3, b3


def reference_forward(x, params):
    w1, b1, w2, b2, w3, b3 = params
    h1 = jnp.maximum(x @ w1 + b1, 0.0)
    h2 = jnp.maximum(h1 @ w2 + b2, 0.0)
    return h2 @ w3 + b3


if __name__ == "__main__":
    key = jax.random.PRNGKey(0)
    k_x, k_p = jax.random.split(key)

    batch = 8
    input_size = 32
    x = jax.random.normal(k_x, (batch, input_size), jnp.float32)
    params = init_params(k_p, input_size)
    padded = pad_params(params)

    out = mlp_forward(x, padded)
    out = jax.block_until_ready(out)

    ref = reference_forward(x, params)
    assert out.shape == (batch, 1), out.shape
    assert jnp.allclose(out, ref, atol=1e-4, rtol=1e-4), "mismatch vs reference"

    print("KERNEL_OK")
</pallas_src>

<mosaic_0001>
module attributes {stable_mosaic.version = 11 : i64} {
  func.func @mlp_kernel(%arg0: i32, %arg1: memref<8x32xf32, #tpu.memory_space<vmem>>, %arg2: memref<32x384xf32, #tpu.memory_space<vmem>>, %arg3: memref<1x384xf32, #tpu.memory_space<vmem>>, %arg4: memref<384x256xf32, #tpu.memory_space<vmem>>, %arg5: memref<1x256xf32, #tpu.memory_space<vmem>>, %arg6: memref<1x256xf32, #tpu.memory_space<vmem>>, %arg7: memref<1x1xf32, #tpu.memory_space<vmem>>, %arg8: memref<8x1xf32, #tpu.memory_space<vmem>>) attributes {dimension_semantics = [#tpu.dimension_semantics<parallel>], iteration_bounds = array<i64: 1>, scalar_prefetch = 0 : i64, scratch_operands = 0 : i64, tpu.core_type = #tpu.core_type<tc>, window_params = [{transform_indices = @transform_0, window_bounds = array<i64: 8, 32>}, {pipeline_mode = #tpu.pipeline_mode<synchronous>, transform_indices = @transform_1, window_bounds = array<i64: 32, 384>}, {pipeline_mode = #tpu.pipeline_mode<synchronous>, transform_indices = @transform_2, window_bounds = array<i64: 1, 384>}, {pipeline_mode = #tpu.pipeline_mode<synchronous>, transform_indices = @transform_3, window_bounds = array<i64: 384, 256>}, {pipeline_mode = #tpu.pipeline_mode<synchronous>, transform_indices = @transform_4, window_bounds = array<i64: 1, 256>}, {pipeline_mode = #tpu.pipeline_mode<synchronous>, transform_indices = @transform_5, window_bounds = array<i64: 1, 256>}, {pipeline_mode = #tpu.pipeline_mode<synchronous>, transform_indices = @transform_6, window_bounds = array<i64: 1, 1>}, {transform_indices = @transform_7, window_bounds = array<i64: 8, 1>}]} {
    %c0 = arith.constant 0 : index
    %c0_0 = arith.constant 0 : index
    %0 = vector.load %arg1[%c0, %c0_0] : memref<8x32xf32, #tpu.memory_space<vmem>>, vector<8x32xf32>
    %c0_1 = arith.constant 0 : index
    %c0_2 = arith.constant 0 : index
    %1 = vector.load %arg2[%c0_1, %c0_2] : memref<32x384xf32, #tpu.memory_space<vmem>>, vector<32x384xf32>
    %cst = arith.constant dense<0.000000e+00> : vector<8x384xf32>
    %2 = tpu.matmul %0, %1, %cst {dimension_numbers = #tpu.dot_dimension_numbers<[1], [0], [0], [1], [0, 0, 1, 1], [], []>} : vector<8x32xf32>, vector<32x384xf32>, vector<8x384xf32> -> vector<8x384xf32>
    %c0_3 = arith.constant 0 : index
    %c0_4 = arith.constant 0 : index
    %3 = vector.load %arg3[%c0_3, %c0_4] : memref<1x384xf32, #tpu.memory_space<vmem>>, vector<1x384xf32>
    %4 = vector.broadcast %3 : vector<1x384xf32> to vector<8x384xf32>
    %5 = arith.addf %2, %4 : vector<8x384xf32>
    %cst_5 = arith.constant 0.000000e+00 : f32
    %6 = vector.broadcast %cst_5 : f32 to vector<8x384xf32>
    %7 = arith.maximumf %5, %6 : vector<8x384xf32>
    %c0_6 = arith.constant 0 : index
    %c0_7 = arith.constant 0 : index
    %8 = vector.load %arg4[%c0_6, %c0_7] : memref<384x256xf32, #tpu.memory_space<vmem>>, vector<384x256xf32>
    %cst_8 = arith.constant dense<0.000000e+00> : vector<8x256xf32>
    %9 = tpu.matmul %7, %8, %cst_8 {dimension_numbers = #tpu.dot_dimension_numbers<[1], [0], [0], [1], [0, 0, 1, 1], [], []>} : vector<8x384xf32>, vector<384x256xf32>, vector<8x256xf32> -> vector<8x256xf32>
    %c0_9 = arith.constant 0 : index
    %c0_10 = arith.constant 0 : index
    %10 = vector.load %arg5[%c0_9, %c0_10] : memref<1x256xf32, #tpu.memory_space<vmem>>, vector<1x256xf32>
    %11 = vector.broadcast %10 : vector<1x256xf32> to vector<8x256xf32>
    %12 = arith.addf %9, %11 : vector<8x256xf32>
    %cst_11 = arith.constant 0.000000e+00 : f32
    %13 = vector.broadcast %cst_11 : f32 to vector<8x256xf32>
    %14 = arith.maximumf %12, %13 : vector<8x256xf32>
    %c0_12 = arith.constant 0 : index
    %c0_13 = arith.constant 0 : index
    %15 = vector.load %arg6[%c0_12, %c0_13] : memref<1x256xf32, #tpu.memory_space<vmem>>, vector<1x256xf32>
    %16 = vector.broadcast %15 : vector<1x256xf32> to vector<8x256xf32>
    %17 = arith.mulf %14, %16 : vector<8x256xf32>
    %cst_14 = arith.constant dense<0.000000e+00> : vector<8xf32>
    %18 = vector.multi_reduction <add>, %17, %cst_14 [1] : vector<8x256xf32> to vector<8xf32>
    %19 = vector.shape_cast %18 : vector<8xf32> to vector<8x1xf32>
    %c0_15 = arith.constant 0 : index
    %c0_16 = arith.constant 0 : index
    %20 = vector.load %arg7[%c0_15, %c0_16] : memref<1x1xf32, #tpu.memory_space<vmem>>, vector<1x1xf32>
    %21 = vector.broadcast %20 : vector<1x1xf32> to vector<8x1xf32>
    %22 = arith.addf %19, %21 : vector<8x1xf32>
    %c0_17 = arith.constant 0 : index
    %c0_18 = arith.constant 0 : index
    %23 = vector.load %arg8[%c0_17, %c0_18] : memref<8x1xf32, #tpu.memory_space<vmem>>, vector<8x1xf32>
    tpu.vector_store %arg8[%c0_17, %c0_18], %22 {strides = array<i32>} : memref<8x1xf32, #tpu.memory_space<vmem>>, vector<8x1xf32>,
    return
  }
  func.func @transform_0(%arg0: i32) -> (i32, i32) {
    %c0_i32 = arith.constant 0 : i32
    %c0_i32_0 = arith.constant 0 : i32
    return %arg0, %c0_i32 : i32, i32
  }
  func.func @transform_1(%arg0: i32) -> (i32, i32) {
    %c0_i32 = arith.constant 0 : i32
    %c0_i32_0 = arith.constant 0 : i32
    %c0_i32_1 = arith.constant 0 : i32
    return %c0_i32, %c0_i32_0 : i32, i32
  }
  func.func @transform_2(%arg0: i32) -> (i32, i32) {
    %c0_i32 = arith.constant 0 : i32
    %c0_i32_0 = arith.constant 0 : i32
    %c0_i32_1 = arith.constant 0 : i32
    return %c0_i32, %c0_i32_0 : i32, i32
  }
  func.func @transform_3(%arg0: i32) -> (i32, i32) {
    %c0_i32 = arith.constant 0 : i32
    %c0_i32_0 = arith.constant 0 : i32
    %c0_i32_1 = arith.constant 0 : i32
    return %c0_i32, %c0_i32_0 : i32, i32
  }
  func.func @transform_4(%arg0: i32) -> (i32, i32) {
    %c0_i32 = arith.constant 0 : i32
    %c0_i32_0 = arith.constant 0 : i32
    %c0_i32_1 = arith.constant 0 : i32
    return %c0_i32, %c0_i32_0 : i32, i32
  }
  func.func @transform_5(%arg0: i32) -> (i32, i32) {
    %c0_i32 = arith.constant 0 : i32
    %c0_i32_0 = arith.constant 0 : i32
    %c0_i32_1 = arith.constant 0 : i32
    return %c0_i32, %c0_i32_0 : i32, i32
  }
  func.func @transform_6(%arg0: i32) -> (i32, i32) {
    %c0_i32 = arith.constant 0 : i32
    %c0_i32_0 = arith.constant 0 : i32
    %c0_i32_1 = arith.constant 0 : i32
    return %c0_i32, %c0_i32_0 : i32, i32
  }
  func.func @transform_7(%arg0: i32) -> (i32, i32) {
    %c0_i32 = arith.constant 0 : i32
    %c0_i32_0 = arith.constant 0 : i32
    return %arg0, %c0_i32 : i32, i32
  }
}

</mosaic_0001>

<llo_original>
// kernel: tpu_custom_call.1
$region0: #{tpu_custom_call.1}
  #allocation0 [shape = 'u32[]', space=smem, size = 0x4, offset = 0x4, fixed_abs, tag = 'smem constant byte address 0x4 - core index']
  #allocation1 [shape = 'u32[144,128]{1,0:T(1,128)}', space=vmem, size = 0x12000, scoped, tag = 'internal scratch']
  #allocation2 [shape = 'f32[1,1]{1,0:T(1,128)S(1)}', space=vmem, size = 0x200, scoped, tag = 'scoped memory for tpu_custom_call.1']
  %s0 = inlined_call_operand.hbm [shape: f32[8,32], index: 0, kind: input, shape index: {}]
  %s1 = inlined_call_operand.hbm [shape: f32[32,384], index: 1, kind: input, shape index: {}]
  %s2 = inlined_call_operand.vmem [shape: f32[1,384], index: 2, kind: input, shape index: {}]
  %s3 = inlined_call_operand.hbm [shape: f32[384,256], index: 3, kind: input, shape index: {}]
  %s4 = inlined_call_operand.vmem [shape: f32[1,256], index: 4, kind: input, shape index: {}]
  %s5 = inlined_call_operand.vmem [shape: f32[1,256], index: 5, kind: input, shape index: {}]
  %s6 = inlined_call_operand.<no memory space> [shape: f32[1,1], index: 6, kind: input, shape index: {}]
  %s7 = inlined_call_operand.vmem [shape: f32[8,1], index: 7, kind: output, shape index: {}]
  %s8 = sld [smem:[#allocation0]]
  $region50: #{tpu_custom_call.1} parent=0
    _
  %s10 = ssub.s32 1, %s8
  %s11 = scalar_select 0, %s10, %s8
  %v12 = vstv %s6
  %13 = vst [vmem:[#allocation2] sm:$0x1] %v12
  $region1: #{tpu_custom_call.1} parent=0
    #allocation3 [shape = 'u8[4096]{0}', space=vmem, size = 0x1000, scoped, tag = 'input window, operand 0, single buffered']
    #allocation4 [shape = 's32[1]{0}', space=sflag, size = 0x4, scoped, tag = 'scoped memory for tpu_custom_call.1']
    #allocation5 [shape = 'u8[49152]{0}', space=vmem, size = 0xc000, scoped, tag = 'input window, operand 1, single buffered']
    #allocation6 [shape = 's32[1]{0}', space=sflag, size = 0x4, scoped, tag = 'scoped memory for tpu_custom_call.1']
    #allocation7 [shape = 'u8[393216]{0}', space=vmem, size = 0x60000, scoped, tag = 'input window, operand 3, single buffered']
    %14 = vsyncpa [#allocation4], 0
    %15 = vsyncpa [#allocation6], 0
    // Predicated region
    $region2: #{tpu_custom_call.1} parent=1 // pred_check
      _
    $region3: #{tpu_custom_call.1} parent=1 // pred_check_branch
      %17 = sbr.rel (0) target = $region5
    $region4: #{tpu_custom_call.1} parent=1 // pred_region
      %s19 = ssub.s32 128, 128
      %20 = vsyncadd [#allocation4], %s19
      %s22 = sshll.u32 [#allocation3], 4
      %s23 = int_to_ptr.vmem [resolvable:$true] %s22
      %25 = dma.hbm_to_vmem [thread:$0]  %s0, 128, %s23, [#allocation4]
    $region5: #{tpu_custom_call.1} parent=1 // pred_fallthru
      _
    // Predicated region
    $region6: #{tpu_custom_call.1} parent=1 // pred_check
      _
    $region7: #{tpu_custom_call.1} parent=1 // pred_check_branch
      %27 = sbr.rel (0) target = $region9
    $region8: #{tpu_custom_call.1} parent=1 // pred_region
      %s29 = ssub.s32 1536, 1536
      %30 = vsyncadd [#allocation6], %s29
      %s31 = sshll.u32 [#allocation5], 4
      %s32 = int_to_ptr.vmem [resolvable:$true] %s31
      %37 = dma.hbm_to_vmem [thread:$0]  %s1, 1536, %s32, [#allocation6], 384, 384, 24
    $region9: #{tpu_custom_call.1} parent=1 // pred_fallthru
      _
    // Predicated region
    $region10: #{tpu_custom_call.1} parent=1 // pred_check
      _
    $region11: #{tpu_custom_call.1} parent=1 // pred_check_branch
      %39 = sbr.rel (0) target = $region13
    $region12: #{tpu_custom_call.1} parent=1 // pred_region
      _
    $region13: #{tpu_custom_call.1} parent=1 // pred_fallthru
      _
    // Predicated region
    $region14: #{tpu_custom_call.1} parent=1 // pred_check
      _
    $region15: #{tpu_custom_call.1} parent=1 // pred_check_branch
      %41 = sbr.rel (0) target = $region17
    $region16: #{tpu_custom_call.1} parent=1 // pred_region
      %s43 = ssub.s32 12288, 12288
      %44 = vsyncadd [#allocation6], %s43
      %s45 = sshll.u32 [#allocation7], 4
      %s46 = int_to_ptr.vmem [resolvable:$true] %s45
      %51 = dma.hbm_to_vmem [thread:$0]  %s3, 12288, %s46, [#allocation6], 256, 256, 16
    $region17: #{tpu_custom_call.1} parent=1 // pred_fallthru
      _
    // Predicated region
    $region18: #{tpu_custom_call.1} parent=1 // pred_check
      _
    $region19: #{tpu_custom_call.1} parent=1 // pred_check_branch
      %53 = sbr.rel (0) target = $region21
    $region20: #{tpu_custom_call.1} parent=1 // pred_region
      _
    $region21: #{tpu_custom_call.1} parent=1 // pred_fallthru
      _
    // Predicated region
    $region22: #{tpu_custom_call.1} parent=1 // pred_check
      _
    $region23: #{tpu_custom_call.1} parent=1 // pred_check_branch
      %55 = sbr.rel (0) target = $region25
    $region24: #{tpu_custom_call.1} parent=1 // pred_region
      _
    $region25: #{tpu_custom_call.1} parent=1 // pred_fallthru
      _
    // Predicated region
    $region26: #{tpu_custom_call.1} parent=1 // pred_check
      _
    $region27: #{tpu_custom_call.1} parent=1 // pred_check_branch
      %57 = sbr.rel (0) target = $region29
    $region28: #{tpu_custom_call.1} parent=1 // pred_region
      _
    $region29: #{tpu_custom_call.1} parent=1 // pred_fallthru
      _
    // Predicated region
    $region30: #{tpu_custom_call.1} parent=1 // pred_check
      _
    $region31: #{tpu_custom_call.1} parent=1 // pred_check_branch
      %59 = sbr.rel (0) target = $region33
    $region32: #{tpu_custom_call.1} parent=1 // pred_region
      %60 = dma.done [#allocation4], 128
    $region33: #{tpu_custom_call.1} parent=1 // pred_fallthru
      _
    // Predicated region
    $region34: #{tpu_custom_call.1} parent=1 // pred_check
      _
    $region35: #{tpu_custom_call.1} parent=1 // pred_check_branch
      %62 = sbr.rel (0) target = $region37
    $region36: #{tpu_custom_call.1} parent=1 // pred_region
      %63 = dma.done [#allocation6], 1536
    $region37: #{tpu_custom_call.1} parent=1 // pred_fallthru
      _
    // Predicated region
    $region38: #{tpu_custom_call.1} parent=1 // pred_check
      _
    $region39: #{tpu_custom_call.1} parent=1 // pred_check_branch
      %65 = sbr.rel (0) target = $region41
    $region40: #{tpu_custom_call.1} parent=1 // pred_region
      %66 = dma.done [#allocation6], 12288
    $region41: #{tpu_custom_call.1} parent=1 // pred_fallthru
      _
    %v67 = vld [vmem:[#allocation3] sm:$0xff]
    %v68 = vld [vmem:[#allocation5] sm:$0xff]
    %v69 = vld [vmem:[#allocation5 + $0x8] sm:$0xff]
    %v70 = vld [vmem:[#allocation5 + $0x10] sm:$0xff]
    %v71 = vld [vmem:[#allocation5 + $0x18] sm:$0xff]
    %v72 = vld [vmem:[#allocation5 + $0x20] sm:$0xff]
    %v73 = vld [vmem:[#allocation5 + $0x28] sm:$0xff]
    %v74 = vld [vmem:[#allocation5 + $0x30] sm:$0xff]
    %v75 = vld [vmem:[#allocation5 + $0x38] sm:$0xff]
    %v76 = vld [vmem:[#allocation5 + $0x40] sm:$0xff]
    %v77 = vld [vmem:[#allocation5 + $0x48] sm:$0xff]
    %v78 = vld [vmem:[#allocation5 + $0x50] sm:$0xff]
    %v79 = vld [vmem:[#allocation5 + $0x58] sm:$0xff]
    %v80 = vld [vmem:[%s2] sm:$0x7]
    %v82 = vlaneseq
    %v83 = vshrl.u32 %v82, 7
    %v84 = vsub.s32 0, %v83
    %v85 = vrot.slane %v80, %v84
    %v86 = vlaneseq
    %v87 = vshrl.u32 %v86, 7
    %v88 = vsub.s32 1, %v87
    %v89 = vrot.slane %v80, %v88
    %v90 = vlaneseq
    %v91 = vshrl.u32 %v90, 7
    %v92 = vsub.s32 2, %v91
    %v93 = vrot.slane %v80, %v92
    %vm97 = vcmask 261120
    %v99 = vsel %vm97, %v67, 0
    %101 = vmatprep.subr.mxu0 %v69
    %102 = vmatpush1.msra.mxu0 %v68
    %103 = vmatprep.subr.mxu0 %v72
    %104 = vmatpush1.msra.mxu0 %v71
    %105 = vmatprep.subr.mxu0 %v75
    %106 = vmatpush1.msra.mxu0 %v74
    %107 = vmatprep.subr.mxu0 %v78
    %108 = vmatpush1.msra.mxu0 %v77
    %109 = vmatprep.subr.mxu0 0.0
    %110 = vmatpush1.msra.mxu0 0.0
    %111 = vmatprep.subr.mxu0 0.0
    %112 = vmatpush1.msra.mxu0 0.0
    %113 = vmatprep.subr.mxu0 0.0
    %114 = vmatpush1.msra.mxu0 0.0
    %115 = vmatprep.subr.mxu0 0.0
    %116 = vmatpush1.msra.mxu0 0.0
    %117 = vmatprep.subr.mxu0 0.0
    %118 = vmatpush1.msra.mxu0 0.0
    %119 = vmatprep.subr.mxu0 0.0
    %120 = vmatpush1.msra.mxu0 0.0
    %121 = vmatprep.subr.mxu0 0.0
    %122 = vmatpush1.msra.mxu0 0.0
    %123 = vmatprep.subr.mxu0 0.0
    %124 = vmatpush1.msra.mxu0 0.0
    %125 = vmatprep.subr.mxu0 0.0
    %126 = vmatpush1.msra.mxu0 0.0
    %127 = vmatprep.subr.mxu0 0.0
    %128 = vmatpush1.msra.mxu0 0.0
    %129 = vmatprep.subr.mxu0 0.0
    %130 = vmatpush1.msra.mxu0 0.0
    %131 = vmatprep.subr.mxu0 0.0
    %132 = vmatpush1.msra.mxu0 0.0
    %133 = vmatprep.subr.mxu0 0.0
    %134 = vmatpush1.msra.mxu0 0.0
    %135 = vmatprep.subr.mxu0 0.0
    %136 = vmatpush1.msra.mxu0 0.0
    %137 = vmatprep.subr.mxu0 0.0
    %138 = vmatpush1.msra.mxu0 0.0
    %139 = vmatprep.subr.mxu0 0.0
    %140 = vmatpush1.msra.mxu0 0.0
    %141 = vmatprep.subr.mxu0 0.0
    %142 = vmatpush1.msra.mxu0 0.0
    %143 = vmatprep.subr.mxu0 0.0
    %144 = vmatpush1.msra.mxu0 0.0
    %145 = vmatprep.subr.mxu0 0.0
    %146 = vmatpush1.msra.mxu0 0.0
    %147 = vmatprep.subr.mxu0 0.0
    %148 = vmatpush1.msra.mxu0 0.0
    %149 = vmatprep.subr.mxu0 0.0
    %150 = vmatpush1.msra.mxu0 0.0
    %151 = vmatprep.subr.mxu0 0.0
    %152 = vmatpush1.msra.mxu0 0.0
    %153 = vmatprep.subr.mxu0 0.0
    %154 = vmatpush1.msra.mxu0 0.0
    %155 = vmatprep.subr.mxu0 0.0
    %156 = vmatpush1.msra.mxu0 0.0
    %157 = vmatprep.subr.mxu0 0.0
    %158 = vmatpush1.msra.mxu0 0.0
    %159 = vmatprep.subr.mxu0 0.0
    %160 = vmatpush1.msra.mxu0 0.0
    %161 = vmatprep.subr.mxu0 0.0
    %162 = vmatpush1.msra.mxu0 0.0
    %163 = vmatprep.subr.mxu0 0.0
    %164 = vmatpush1.msra.mxu0 0.0
    %165 = vmatprep.mubr.f32.mxu0 0.0
    %166 = vmatmul.mubr.f32.gmra.mrb[0].mxu0 %v99
    %v167 = vpop.f32.mrb[0].mxu0
    %v168 = vadd.f32 %v85, %v167
    %v169 = vpop.f32.mrb[0].mxu0
    %v170 = vadd.f32 %v89, %v169
    %171 = vdwg.mxu0
    %172 = vmatprep.subr.mxu0 0.0
    %173 = vmatpush1.msra.mxu0 %v70
    %174 = vmatprep.subr.mxu0 0.0
    %175 = vmatpush1.msra.mxu0 %v73
    %176 = vmatprep.subr.mxu0 0.0
    %177 = vmatpush1.msra.mxu0 %v76
    %178 = vmatprep.subr.mxu0 0.0
    %179 = vmatpush1.msra.mxu0 %v79
    %180 = vmatprep.subr.mxu0 0.0
    %181 = vmatpush1.msra.mxu0 0.0
    %182 = vmatprep.subr.mxu0 0.0
    %183 = vmatpush1.msra.mxu0 0.0
    %184 = vmatprep.subr.mxu0 0.0
    %185 = vmatpush1.msra.mxu0 0.0
    %186 = vmatprep.subr.mxu0 0.0
    %187 = vmatpush1.msra.mxu0 0.0
    %188 = vmatprep.subr.mxu0 0.0
    %189 = vmatpush1.msra.mxu0 0.0
    %190 = vmatprep.subr.mxu0 0.0
    %191 = vmatpush1.msra.mxu0 0.0
    %192 = vmatprep.subr.mxu0 0.0
    %193 = vmatpush1.msra.mxu0 0.0
    %194 = vmatprep.subr.mxu0 0.0
    %195 = vmatpush1.msra.mxu0 0.0
    %196 = vmatprep.subr.mxu0 0.0
    %197 = vmatpush1.msra.mxu0 0.0
    %198 = vmatprep.subr.mxu0 0.0
    %199 = vmatpush1.msra.mxu0 0.0
    %200 = vmatprep.subr.mxu0 0.0
    %201 = vmatpush1.msra.mxu0 0.0
    %202 = vmatprep.subr.mxu0 0.0
    %203 = vmatpush1.msra.mxu0 0.0
    %204 = vmatprep.subr.mxu0 0.0
    %205 = vmatpush1.msra.mxu0 0.0
    %206 = vmatprep.subr.mxu0 0.0
    %207 = vmatpush1.msra.mxu0 0.0
    %208 = vmatprep.subr.mxu0 0.0
    %209 = vmatpush1.msra.mxu0 0.0
    %210 = vmatprep.subr.mxu0 0.0
    %211 = vmatpush1.msra.mxu0 0.0
    %212 = vmatprep.subr.mxu0 0.0
    %213 = vmatpush1.msra.mxu0 0.0
    %214 = vmatprep.subr.mxu0 0.0
    %215 = vmatpush1.msra.mxu0 0.0
    %216 = vmatprep.subr.mxu0 0.0
    %217 = vmatpush1.msra.mxu0 0.0
    %218 = vmatprep.subr.mxu0 0.0
    %219 = vmatpush1.msra.mxu0 0.0
    %220 = vmatprep.subr.mxu0 0.0
    %221 = vmatpush1.msra.mxu0 0.0
    %222 = vmatprep.subr.mxu0 0.0
    %223 = vmatpush1.msra.mxu0 0.0
    %224 = vmatprep.subr.mxu0 0.0
    %225 = vmatpush1.msra.mxu0 0.0
    %226 = vmatprep.subr.mxu0 0.0
    %227 = vmatpush1.msra.mxu0 0.0
    %228 = vmatprep.subr.mxu0 0.0
    %229 = vmatpush1.msra.mxu0 0.0
    %230 = vmatprep.subr.mxu0 0.0
    %231 = vmatpush1.msra.mxu0 0.0
    %232 = vmatprep.subr.mxu0 0.0
    %233 = vmatpush1.msra.mxu0 0.0
    %234 = vmatprep.subr.mxu0 0.0
    %235 = vmatpush1.msra.mxu0 0.0
    %236 = vmatprep.mubr.f32.mxu0 0.0
    %237 = vmatmul.mubr.f32.gmra.mrb[0].mxu0 %v99
    %v238 = vpop.f32.mrb[0].mxu0
    %v239 = vadd.f32 %v93, %v238
    %v240 = vpop.f32.mrb[0].mxu0
    %241 = vdwg.mxu0
    %v242 = vmax.f32 %v168, 0.0
    %v243 = vmax.f32 %v170, 0.0
    %v244 = vmax.f32 %v239, 0.0
    %v245 = vld [vmem:[#allocation7] sm:$0xff]
    %v246 = vld [vmem:[#allocation7 + $0x8] sm:$0xff]
    %v247 = vld [vmem:[#allocation7 + $0x10] sm:$0xff]
    %v248 = vld [vmem:[#allocation7 + $0x18] sm:$0xff]
    %v249 = vld [vmem:[#allocation7 + $0x20] sm:$0xff]
    %v250 = vld [vmem:[#allocation7 + $0x28] sm:$0xff]
    %v251 = vld [vmem:[#allocation7 + $0x30] sm:$0xff]
    %v252 = vld [vmem:[#allocation7 + $0x38] sm:$0xff]
    %v253 = vld [vmem:[#allocation7 + $0x40] sm:$0xff]
    %v254 = vld [vmem:[#allocation7 + $0x48] sm:$0xff]
    %v255 = vld [vmem:[#allocation7 + $0x50] sm:$0xff]
    %v256 = vld [vmem:[#allocation7 + $0x58] sm:$0xff]
    %v257 = vld [vmem:[#allocation7 + $0x60] sm:$0xff]
    %v258 = vld [vmem:[#allocation7 + $0x68] sm:$0xff]
    %v259 = vld [vmem:[#allocation7 + $0x70] sm:$0xff]
    %v260 = vld [vmem:[#allocation7 + $0x78] sm:$0xff]
    %v261 = vld [vmem:[#allocation7 + $0x80] sm:$0xff]
    %v262 = vld [vmem:[#allocation7 + $0x88] sm:$0xff]
    %v263 = vld [vmem:[#allocation7 + $0x90] sm:$0xff]
    %v264 = vld [vmem:[#allocation7 + $0x98] sm:$0xff]
    %v265 = vld [vmem:[#allocation7 + $0xa0] sm:$0xff]
    %v266 = vld [vmem:[#allocation7 + $0xa8] sm:$0xff]
    %v267 = vld [vmem:[#allocation7 + $0xb0] sm:$0xff]
    %v268 = vld [vmem:[#allocation7 + $0xb8] sm:$0xff]
    %v269 = vld [vmem:[#allocation7 + $0xc0] sm:$0xff]
    %v270 = vld [vmem:[#allocation7 + $0xc8] sm:$0xff]
    %v271 = vld [vmem:[#allocation7 + $0xd0] sm:$0xff]
    %v272 = vld [vmem:[#allocation7 + $0xd8] sm:$0xff]
    %v273 = vld [vmem:[#allocation7 + $0xe0] sm:$0xff]
    %v274 = vld [vmem:[#allocation7 + $0xe8] sm:$0xff]
    %v275 = vld [vmem:[#allocation7 + $0xf0] sm:$0xff]
    %v276 = vld [vmem:[#allocation7 + $0xf8] sm:$0xff]
    %v277 = vld [vmem:[#allocation7 + $0x100] sm:$0xff]
    %v278 = vld [vmem:[#allocation7 + $0x108] sm:$0xff]
    %v279 = vld [vmem:[#allocation7 + $0x110] sm:$0xff]
    %v280 = vld [vmem:[#allocation7 + $0x118] sm:$0xff]
    %v281 = vld [vmem:[#allocation7 + $0x120] sm:$0xff]
    %v282 = vld [vmem:[#allocation7 + $0x128] sm:$0xff]
    %v283 = vld [vmem:[#allocation7 + $0x130] sm:$0xff]
    %v284 = vld [vmem:[#allocation7 + $0x138] sm:$0xff]
    %v285 = vld [vmem:[#allocation7 + $0x140] sm:$0xff]
    %v286 = vld [vmem:[#allocation7 + $0x148] sm:$0xff]
    %v287 = vld [vmem:[#allocation7 + $0x150] sm:$0xff]
    %v288 = vld [vmem:[#allocation7 + $0x158] sm:$0xff]
    %v289 = vld [vmem:[#allocation7 + $0x160] sm:$0xff]
    %v290 = vld [vmem:[#allocation7 + $0x168] sm:$0xff]
    %v291 = vld [vmem:[#allocation7 + $0x170] sm:$0xff]
    %v292 = vld [vmem:[#allocation7 + $0x178] sm:$0xff]
    %v293 = vld [vmem:[#allocation7 + $0x180] sm:$0xff]
    %v294 = vld [vmem:[#allocation7 + $0x188] sm:$0xff]
    %v295 = vld [vmem:[#allocation7 + $0x190] sm:$0xff]
    %v296 = vld [vmem:[#allocation7 + $0x198] sm:$0xff]
    %v297 = vld [vmem:[#allocation7 + $0x1a0] sm:$0xff]
    %v298 = vld [vmem:[#allocation7 + $0x1a8] sm:$0xff]
    %v299 = vld [vmem:[#allocation7 + $0x1b0] sm:$0xff]
    %v300 = vld [vmem:[#allocation7 + $0x1b8] sm:$0xff]
    %v301 = vld [vmem:[#allocation7 + $0x1c0] sm:$0xff]
    %v302 = vld [vmem:[#allocation7 + $0x1c8] sm:$0xff]
    %v303 = vld [vmem:[#allocation7 + $0x1d0] sm:$0xff]
    %v304 = vld [vmem:[#allocation7 + $0x1d8] sm:$0xff]
    %v305 = vld [vmem:[#allocation7 + $0x1e0] sm:$0xff]
    %v306 = vld [vmem:[#allocation7 + $0x1e8] sm:$0xff]
    %v307 = vld [vmem:[#allocation7 + $0x1f0] sm:$0xff]
    %v308 = vld [vmem:[#allocation7 + $0x1f8] sm:$0xff]
    %v309 = vld [vmem:[#allocation7 + $0x200] sm:$0xff]
    %v310 = vld [vmem:[#allocation7 + $0x208] sm:$0xff]
    %v311 = vld [vmem:[#allocation7 + $0x210] sm:$0xff]
    %v312 = vld [vmem:[#allocation7 + $0x218] sm:$0xff]
    %v313 = vld [vmem:[#allocation7 + $0x220] sm:$0xff]
    %v314 = vld [vmem:[#allocation7 + $0x228] sm:$0xff]
    %v315 = vld [vmem:[#allocation7 + $0x230] sm:$0xff]
    %v316 = vld [vmem:[#allocation7 + $0x238] sm:$0xff]
    %v317 = vld [vmem:[#allocation7 + $0x240] sm:$0xff]
    %v318 = vld [vmem:[#allocation7 + $0x248] sm:$0xff]
    %v319 = vld [vmem:[#allocation7 + $0x250] sm:$0xff]
    %v320 = vld [vmem:[#allocation7 + $0x258] sm:$0xff]
    %v321 = vld [vmem:[#allocation7 + $0x260] sm:$0xff]
    %v322 = vld [vmem:[#allocation7 + $0x268] sm:$0xff]
    %v323 = vld [vmem:[#allocation7 + $0x270] sm:$0xff]
    %v324 = vld [vmem:[#allocation7 + $0x278] sm:$0xff]
    %v325 = vld [vmem:[#allocation7 + $0x280] sm:$0xff]
    %v326 = vld [vmem:[#allocation7 + $0x288] sm:$0xff]
    %v327 = vld [vmem:[#allocation7 + $0x290] sm:$0xff]
    %v328 = vld [vmem:[#allocation7 + $0x298] sm:$0xff]
    %v329 = vld [vmem:[#allocation7 + $0x2a0] sm:$0xff]
    %v330 = vld [vmem:[#allocation7 + $0x2a8] sm:$0xff]
    %v331 = vld [vmem:[#allocation7 + $0x2b0] sm:$0xff]
    %v332 = vld [vmem:[#allocation7 + $0x2b8] sm:$0xff]
    %v333 = vld [vmem:[#allocation7 + $0x2c0] sm:$0xff]
    %v334 = vld [vmem:[#allocation7 + $0x2c8] sm:$0xff]
    %v335 = vld [vmem:[#allocation7 + $0x2d0] sm:$0xff]
    %v336 = vld [vmem:[#allocation7 + $0x2d8] sm:$0xff]
    %v337 = vld [vmem:[#allocation7 + $0x2e0] sm:$0xff]
    %v338 = vld [vmem:[#allocation7 + $0x2e8] sm:$0xff]
    %v339 = vld [vmem:[#allocation7 + $0x2f0] sm:$0xff]
    %v340 = vld [vmem:[#allocation7 + $0x2f8] sm:$0xff]
    %v341 = vld [vmem:[%s4] sm:$0x3]
    %v343 = vlaneseq
    %v344 = vshrl.u32 %v343, 7
    %v345 = vsub.s32 0, %v344
    %v346 = vrot.slane %v341, %v345
    %v347 = vlaneseq
    %v348 = vshrl.u32 %v347, 7
    %v349 = vsub.s32 1, %v348
    %v350 = vrot.slane %v341, %v349
    %353 = vmatprep.subr.mxu0 %v246
    %354 = vmatpush1.msra.mxu0 %v245
    %355 = vmatprep.subr.mxu0 %v248
    %356 = vmatpush1.msra.mxu0 %v247
    %357 = vmatprep.subr.mxu0 %v250
    %358 = vmatpush1.msra.mxu0 %v249
    %359 = vmatprep.subr.mxu0 %v252
    %360 = vmatpush1.msra.mxu0 %v251
    %361 = vmatprep.subr.mxu0 %v254
    %362 = vmatpush1.msra.mxu0 %v253
    %363 = vmatprep.subr.mxu0 %v256
    %364 = vmatpush1.msra.mxu0 %v255
    %365 = vmatprep.subr.mxu0 %v258
    %366 = vmatpush1.msra.mxu0 %v257
    %367 = vmatprep.subr.mxu0 %v260
    %368 = vmatpush1.msra.mxu0 %v259
    %369 = vmatprep.subr.mxu0 %v262
    %370 = vmatpush1.msra.mxu0 %v261
    %371 = vmatprep.subr.mxu0 %v264
    %372 = vmatpush1.msra.mxu0 %v263
    %373 = vmatprep.subr.mxu0 %v266
    %374 = vmatpush1.msra.mxu0 %v265
    %375 = vmatprep.subr.mxu0 %v268
    %376 = vmatpush1.msra.mxu0 %v267
    %377 = vmatprep.subr.mxu0 %v270
    %378 = vmatpush1.msra.mxu0 %v269
    %379 = vmatprep.subr.mxu0 %v272
    %380 = vmatpush1.msra.mxu0 %v271
    %381 = vmatprep.subr.mxu0 %v274
    %382 = vmatpush1.msra.mxu0 %v273
    %383 = vmatprep.subr.mxu0 %v276
    %384 = vmatpush1.msra.mxu0 %v275
    %385 = vmatprep.subr.mxu0 %v278
    %386 = vmatpush1.msra.mxu0 %v277
    %387 = vmatprep.subr.mxu0 %v280
    %388 = vmatpush1.msra.mxu0 %v279
    %389 = vmatprep.subr.mxu0 %v282
    %390 = vmatpush1.msra.mxu0 %v281
    %391 = vmatprep.subr.mxu0 %v284
    %392 = vmatpush1.msra.mxu0 %v283
    %393 = vmatprep.subr.mxu0 %v286
    %394 = vmatpush1.msra.mxu0 %v285
    %395 = vmatprep.subr.mxu0 %v288
    %396 = vmatpush1.msra.mxu0 %v287
    %397 = vmatprep.subr.mxu0 %v290
    %398 = vmatpush1.msra.mxu0 %v289
    %399 = vmatprep.subr.mxu0 %v292
    %400 = vmatpush1.msra.mxu0 %v291
    %401 = vmatprep.subr.mxu0 %v294
    %402 = vmatpush1.msra.mxu0 %v293
    %403 = vmatprep.subr.mxu0 %v296
    %404 = vmatpush1.msra.mxu0 %v295
    %405 = vmatprep.subr.mxu0 %v298
    %406 = vmatpush1.msra.mxu0 %v297
    %407 = vmatprep.subr.mxu0 %v300
    %408 = vmatpush1.msra.mxu0 %v299
    %409 = vmatprep.subr.mxu0 %v302
    %410 = vmatpush1.msra.mxu0 %v301
    %411 = vmatprep.subr.mxu0 %v304
    %412 = vmatpush1.msra.mxu0 %v303
    %413 = vmatprep.subr.mxu0 %v306
    %414 = vmatpush1.msra.mxu0 %v305
    %415 = vmatprep.subr.mxu0 %v308
    %416 = vmatpush1.msra.mxu0 %v307
    %417 = vmatprep.mubr.f32.mxu0 %v243
    %418 = vmatmul.mubr.f32.gmra.mrb[0].mxu0 %v242
    %v419 = vpop.f32.mrb[0].mxu0
    %v420 = vadd.f32 %v346, %v419
    %v421 = vpop.f32.mrb[0].mxu0
    %v422 = vadd.f32 %v350, %v421
    %423 = vdwg.mxu0
    %424 = vmatprep.subr.mxu0 %v310
    %425 = vmatpush1.msra.mxu0 %v309
    %426 = vmatprep.subr.mxu0 %v312
    %427 = vmatpush1.msra.mxu0 %v311
    %428 = vmatprep.subr.mxu0 %v314
    %429 = vmatpush1.msra.mxu0 %v313
    %430 = vmatprep.subr.mxu0 %v316
    %431 = vmatpush1.msra.mxu0 %v315
    %432 = vmatprep.subr.mxu0 %v318
    %433 = vmatpush1.msra.mxu0 %v317
    %434 = vmatprep.subr.mxu0 %v320
    %435 = vmatpush1.msra.mxu0 %v319
    %436 = vmatprep.subr.mxu0 %v322
    %437 = vmatpush1.msra.mxu0 %v321
    %438 = vmatprep.subr.mxu0 %v324
    %439 = vmatpush1.msra.mxu0 %v323
    %440 = vmatprep.subr.mxu0 %v326
    %441 = vmatpush1.msra.mxu0 %v325
    %442 = vmatprep.subr.mxu0 %v328
    %443 = vmatpush1.msra.mxu0 %v327
    %444 = vmatprep.subr.mxu0 %v330
    %445 = vmatpush1.msra.mxu0 %v329
    %446 = vmatprep.subr.mxu0 %v332
    %447 = vmatpush1.msra.mxu0 %v331
    %448 = vmatprep.subr.mxu0 %v334
    %449 = vmatpush1.msra.mxu0 %v333
    %450 = vmatprep.subr.mxu0 %v336
    %451 = vmatpush1.msra.mxu0 %v335
    %452 = vmatprep.subr.mxu0 %v338
    %453 = vmatpush1.msra.mxu0 %v337
    %454 = vmatprep.subr.mxu0 %v340
    %455 = vmatpush1.msra.mxu0 %v339
    %456 = vmatprep.subr.mxu0 0.0
    %457 = vmatpush1.msra.mxu0 0.0
    %458 = vmatprep.subr.mxu0 0.0
    %459 = vmatpush1.msra.mxu0 0.0
    %460 = vmatprep.subr.mxu0 0.0
    %461 = vmatpush1.msra.mxu0 0.0
    %462 = vmatprep.subr.mxu0 0.0
    %463 = vmatpush1.msra.mxu0 0.0
    %464 = vmatprep.subr.mxu0 0.0
    %465 = vmatpush1.msra.mxu0 0.0
    %466 = vmatprep.subr.mxu0 0.0
    %467 = vmatpush1.msra.mxu0 0.0
    %468 = vmatprep.subr.mxu0 0.0
    %469 = vmatpush1.msra.mxu0 0.0
    %470 = vmatprep.subr.mxu0 0.0
    %471 = vmatpush1.msra.mxu0 0.0
    %472 = vmatprep.subr.mxu0 0.0
    %473 = vmatpush1.msra.mxu0 0.0
    %474 = vmatprep.subr.mxu0 0.0
    %475 = vmatpush1.msra.mxu0 0.0
    %476 = vmatprep.subr.mxu0 0.0
    %477 = vmatpush1.msra.mxu0 0.0
    %478 = vmatprep.subr.mxu0 0.0
    %479 = vmatpush1.msra.mxu0 0.0
    %480 = vmatprep.subr.mxu0 0.0
    %481 = vmatpush1.msra.mxu0 0.0
    %482 = vmatprep.subr.mxu0 0.0
    %483 = vmatpush1.msra.mxu0 0.0
    %484 = vmatprep.subr.mxu0 0.0
    %485 = vmatpush1.msra.mxu0 0.0
    %486 = vmatprep.subr.mxu0 0.0
    %487 = vmatpush1.msra.mxu0 0.0
    %488 = vmatprep.mubr.f32.mxu0 0.0
    %489 = vmatmul.mubr.f32.gmra.mrb[0].mxu0 %v244
    %v490 = vpop.f32.mrb[0].mxu0
    %v491 = vadd.f32 %v420, %v490
    %v492 = vpop.f32.mrb[0].mxu0
    %v493 = vadd.f32 %v422, %v492
    %494 = vdwg.mxu0
    %v495 = vmax.f32 %v491, 0.0
    %v496 = vmax.f32 %v493, 0.0
    %v497 = vld [vmem:[%s5] sm:$0x3]
    %v499 = vlaneseq
    %v500 = vshrl.u32 %v499, 7
    %v501 = vsub.s32 0, %v500
    %v502 = vrot.slane %v497, %v501
    %v503 = vlaneseq
    %v504 = vshrl.u32 %v503, 7
    %v505 = vsub.s32 1, %v504
    %v506 = vrot.slane %v497, %v505
    %v509 = vmul.f32 %v495, %v502
    %v510 = vmul.f32 %v496, %v506
    %v511 = vadd.f32 %v509, %v510
    %512 = vadd.xlane.f32.xlu0 %v511
    %v513 = vpop.xlane.xlu0 %512
    %v514 = vld [vmem:[#allocation2] sm:$0x1]
    %v516 = vlaneseq
    %v517 = vshrl.u32 %v516, 7
    %v518 = vsub.s32 0, %v517
    %v519 = vrot.slane %v514, %v518
    %v521 = vadd.f32 %v513, %v519
    %vm522 = vcmask 7168
    %523 = vst.msk [vmem:[%s7] sm:$0xff] %vm522, %v521
    // Predicated region
    $region42: #{tpu_custom_call.1} parent=1 // pred_check
      _
    $region43: #{tpu_custom_call.1} parent=1 // pred_check_branch
      %525 = sbr.rel (0) target = $region45
    $region44: #{tpu_custom_call.1} parent=1 // pred_region
      _
    $region45: #{tpu_custom_call.1} parent=1 // pred_fallthru
      _
    // Predicated region
    $region46: #{tpu_custom_call.1} parent=1 // pred_check
      _
    $region47: #{tpu_custom_call.1} parent=1 // pred_check_branch
      %527 = sbr.rel (0) target = $region49
    $region48: #{tpu_custom_call.1} parent=1 // pred_region
      _
    $region49: #{tpu_custom_call.1} parent=1 // pred_fallthru
      _
    %528 = vsyncpa [#allocation4], 1
    %529 = vsyncpa [#allocation6], 1

</llo_original>
